<compile_context>
chip_gen: v6e
topology: v6e:2x2x1
jax: 0.10.0
libtpu: 0.0.40
codegen_flags: <defaults>
</compile_context>

<pallas_src>
import functools

import jax
import jax.numpy as jnp
from jax import lax
from jax.experimental import pallas as pl
from jax.experimental.pallas import tpu as pltpu

_LANES = 128


def _softplus(x):
    # softplus(x) = max(x, 0) + log1p(exp(-|x|)); avoids materializing a zeros vreg.
    return jnp.maximum(x, 0.0) + jnp.log1p(jnp.exp(-jnp.abs(x)))


def _latent_kernel(mu_ref, ls_ref, eps_ref, sample_ref, kl_ref, *,
                   total_valid, needs_mask):
    mu = mu_ref[...]
    ls = ls_ref[...]
    eps = eps_ref[...]

    sigma = _softplus(ls)

    # Reparameterized sample: lane-dense 128-wide unmasked store.
    sample_ref[...] = mu + sigma * eps

    # Stable log(sigma): for very negative ls softplus underflows to 0; there
    # log(softplus(ls)) ~= ls, so branch instead of producing -inf.
    # (3 transcendentals/elem total; hidden behind HBM on v5e/v6e, re-check EUP on v7x.)
    tiny = jnp.float32(jnp.finfo(jnp.float32).tiny)
    log_sigma = jnp.where(ls < -20.0, ls, jnp.log(jnp.maximum(sigma, tiny)))

    # Elementwise KL( N(mu, sigma) || N(0, 1) ).
    kl_elem = 0.5 * (sigma * sigma + mu * mu - 1.0) - log_sigma

    if needs_mask:
        # Only compiled in when the flat element count is not 128-aligned or the last
        # grid block is ragged; masks lane padding and OOB-row garbage out of the KL.
        i = pl.program_id(0)
        tr, lanes = mu.shape
        in_tile = (lax.broadcasted_iota(jnp.int32, (tr, lanes), 0) * lanes
                   + lax.broadcasted_iota(jnp.int32, (tr, lanes), 1))
        rem = total_valid - i * (tr * lanes)   # int32; wrapper asserts no overflow
        kl_elem = jnp.where(in_tile < rem, kl_elem, 0.0)

    # Per-tile partial KL, broadcast into this tile's own (1, 8, 128) output block so the
    # grid axis can be megacore-parallel (no resident output -> no writeback race).
    kl_ref[...] = jnp.zeros(kl_ref.shape, jnp.float32) + jnp.sum(kl_elem)


def latent_variable_forward(q_mu, q_log_sigma, eps, *, tile_rows=4096):
    """Returns (sample, kl): sample = q_mu + softplus(q_log_sigma)*eps,
    kl = (1/n) * sum KL(N(q_mu, softplus(q_log_sigma)) || N(0, 1))."""
    n, d = q_mu.shape
    total = n * d

    # Lane-dense layout: view the flat (n*d,) vector as (rows, 128).
    rows = -(-total // _LANES)
    pad_lane = rows * _LANES - total
    assert rows * _LANES < 2 ** 31, "int32 flat-index masking would overflow"

    if rows <= tile_rows:
        tile_rows = rows                       # single tile == full array (always legal)
        num_tiles = 1
    else:                                      # tile_rows=4096 is a multiple of 8
        num_tiles = -(-rows // tile_rows)

    # Mask is only needed for lane padding or a ragged last row-block.
    needs_mask = (pad_lane > 0) or (num_tiles * tile_rows != rows)

    orig_dtype = q_mu.dtype

    def to2d(a):
        flat = a.reshape(-1)
        if flat.dtype != jnp.float32:
            flat = flat.astype(jnp.float32)
        if pad_lane:                           # slow path only: one pad copy per input
            flat = jnp.pad(flat, (0, pad_lane))
        return flat.reshape(rows, _LANES)      # free bitcast in the aligned fast path

    mu2d, ls2d, eps2d = to2d(q_mu), to2d(q_log_sigma), to2d(eps)

    tile_spec = pl.BlockSpec((tile_rows, _LANES), lambda i: (i, 0))
    kl_spec = pl.BlockSpec((1, 8, _LANES), lambda i: (i, 0, 0))

    # Alias sample onto eps only when eps2d is an owned (padded) intermediate.
    aliases = {2: 0} if pad_lane else {}

    sample2d, kl_parts = pl.pallas_call(
        functools.partial(_latent_kernel, total_valid=total, needs_mask=needs_mask),
        grid=(num_tiles,),
        in_specs=[tile_spec, tile_spec, tile_spec],
        out_specs=[
            tile_spec,                                   # reparameterized sample
            kl_spec,                                     # per-tile partial KL sums
        ],
        out_shape=[
            jax.ShapeDtypeStruct((rows, _LANES), jnp.float32),
            jax.ShapeDtypeStruct((num_tiles, 8, _LANES), jnp.float32),
        ],
        input_output_aliases=aliases,
        compiler_params=pltpu.CompilerParams(
            # Each tile writes disjoint blocks of both outputs -> safe to shard across
            # TensorCores (matters on v7x; harmless on single-TC v5e/v6e).
            dimension_semantics=("parallel",),
            # 16 MiB of double-buffered blocks at tile_rows=4096; safe on v7x's 64 MiB VMEM.
            vmem_limit_bytes=32 * 1024 * 1024,
        ),
        cost_estimate=pl.CostEstimate(
            flops=12 * rows * _LANES,
            transcendentals=3 * rows * _LANES,
            bytes_accessed=16 * rows * _LANES,
        ),
    )(mu2d, ls2d, eps2d)

    if pad_lane:
        sample = sample2d.reshape(-1)[:total].reshape(n, d)
    else:
        sample = sample2d.reshape(n, d)        # free bitcast, no slice
    if sample.dtype != orig_dtype:
        sample = sample.astype(orig_dtype)

    kl = jnp.sum(kl_parts[:, 0, 0]) * (1.0 / n)   # mean KL per data point (n is static)
    return sample, kl


if __name__ == "__main__":
    n, latent_dim = 8, 32                      # LatentVariable(n=8, dim=32)

    key = jax.random.PRNGKey(0)
    k_mu, k_ls, k_eps = jax.random.split(key, 3)

    # deterministic "learned" parameters; x acts as the standard-normal noise
    q_mu = jax.random.normal(k_mu, (n, latent_dim), dtype=jnp.float32)
    q_log_sigma = 0.1 * jax.random.normal(k_ls, (n, latent_dim), dtype=jnp.float32)
    eps = jax.random.normal(k_eps, (n, latent_dim), dtype=jnp.float32)

    # plain-JAX reference
    sigma_ref = _softplus(q_log_sigma)
    sample_ref = q_mu + sigma_ref * eps
    kl_ref = jnp.sum(0.5 * (sigma_ref ** 2 + q_mu ** 2 - 1.0) - jnp.log(sigma_ref)) / n
    sample_ref, kl_ref = jax.block_until_ready((sample_ref, kl_ref))

    sample, kl = latent_variable_forward(q_mu, q_log_sigma, eps)
    jax.block_until_ready((sample, kl))

    assert jnp.allclose(sample, sample_ref, atol=1e-5), "sample mismatch"
    assert jnp.allclose(kl, kl_ref, atol=1e-4), "kl mismatch"

    print("KERNEL_OK")
</pallas_src>

<mosaic_0001>
module attributes {stable_mosaic.version = 11 : i64} {
  func.func @_latent_kernel(%arg0: i32, %arg1: memref<2x128xf32, #tpu.memory_space<vmem>>, %arg2: memref<2x128xf32, #tpu.memory_space<vmem>>, %arg3: memref<2x128xf32, #tpu.memory_space<vmem>>, %arg4: memref<2x128xf32, #tpu.memory_space<vmem>>, %arg5: memref<1x8x128xf32, #tpu.memory_space<vmem>>) attributes {dimension_semantics = [#tpu.dimension_semantics<parallel>], iteration_bounds = array<i64: 1>, scalar_prefetch = 0 : i64, scratch_operands = 0 : i64, tpu.core_type = #tpu.core_type<tc>, window_params = [{transform_indices = @transform_0, window_bounds = array<i64: 2, 128>}, {transform_indices = @transform_1, window_bounds = array<i64: 2, 128>}, {transform_indices = @transform_2, window_bounds = array<i64: 2, 128>}, {transform_indices = @transform_3, window_bounds = array<i64: 2, 128>}, {transform_indices = @transform_4, window_bounds = array<i64: 1, 8, 128>}]} {
    %c0 = arith.constant 0 : index
    %c0_0 = arith.constant 0 : index
    %0 = vector.load %arg1[%c0, %c0_0] : memref<2x128xf32, #tpu.memory_space<vmem>>, vector<2x128xf32>
    %c0_1 = arith.constant 0 : index
    %c0_2 = arith.constant 0 : index
    %1 = vector.load %arg2[%c0_1, %c0_2] : memref<2x128xf32, #tpu.memory_space<vmem>>, vector<2x128xf32>
    %c0_3 = arith.constant 0 : index
    %c0_4 = arith.constant 0 : index
    %2 = vector.load %arg3[%c0_3, %c0_4] : memref<2x128xf32, #tpu.memory_space<vmem>>, vector<2x128xf32>
    %cst = arith.constant 0.000000e+00 : f32
    %3 = vector.broadcast %cst : f32 to vector<2x128xf32>
    %4 = arith.maximumf %1, %3 : vector<2x128xf32>
    %5 = math.absf %1 : vector<2x128xf32>
    %cst_5 = arith.constant 0.000000e+00 : f32
    %6 = vector.broadcast %cst_5 : f32 to vector<2x128xf32>
    %7 = arith.subf %6, %5 : vector<2x128xf32>
    %8 = math.exp %7 : vector<2x128xf32>
    %9 = math.log1p %8 : vector<2x128xf32>
    %10 = arith.addf %4, %9 : vector<2x128xf32>
    %11 = arith.mulf %10, %2 : vector<2x128xf32>
    %12 = arith.addf %0, %11 : vector<2x128xf32>
    %c0_6 = arith.constant 0 : index
    %c0_7 = arith.constant 0 : index
    %13 = vector.load %arg4[%c0_6, %c0_7] : memref<2x128xf32, #tpu.memory_space<vmem>>, vector<2x128xf32>
    tpu.vector_store %arg4[%c0_6, %c0_7], %12 {strides = array<i32>} : memref<2x128xf32, #tpu.memory_space<vmem>>, vector<2x128xf32>,
    %cst_8 = arith.constant -2.000000e+01 : f32
    %14 = vector.broadcast %cst_8 : f32 to vector<2x128xf32>
    %15 = arith.cmpf olt, %1, %14 : vector<2x128xf32>
    %cst_9 = arith.constant 1.17549435E-38 : f32
    %16 = vector.broadcast %cst_9 : f32 to vector<2x128xf32>
    %17 = arith.maximumf %10, %16 : vector<2x128xf32>
    %18 = math.log %17 : vector<2x128xf32>
    %19 = arith.select %15, %1, %18 : vector<2x128xi1>, vector<2x128xf32>
    %20 = arith.mulf %10, %10 : vector<2x128xf32>
    %21 = arith.mulf %0, %0 : vector<2x128xf32>
    %22 = arith.addf %20, %21 : vector<2x128xf32>
    %cst_10 = arith.constant 1.000000e+00 : f32
    %23 = vector.broadcast %cst_10 : f32 to vector<2x128xf32>
    %24 = arith.subf %22, %23 : vector<2x128xf32>
    %cst_11 = arith.constant 5.000000e-01 : f32
    %25 = vector.broadcast %cst_11 : f32 to vector<2x128xf32>
    %26 = arith.mulf %25, %24 : vector<2x128xf32>
    %27 = arith.subf %26, %19 : vector<2x128xf32>
    %cst_12 = arith.constant 0.000000e+00 : f32
    %28 = vector.broadcast %cst_12 : f32 to vector<1x8x128xf32>
    %29 = vector.shape_cast %27 : vector<2x128xf32> to vector<1x2x128xf32>
    %cst_13 = arith.constant dense<0.000000e+00> : vector<1xf32>
    %30 = vector.multi_reduction <add>, %29, %cst_13 [1, 2] : vector<1x2x128xf32> to vector<1xf32>
    %31 = vector.shape_cast %30 : vector<1xf32> to vector<1x1x1xf32>
    %32 = vector.extract %31[0, 0, 0] : f32 from vector<1x1x1xf32>
    %33 = vector.broadcast %32 : f32 to vector<1x8x128xf32>
    %34 = arith.addf %28, %33 : vector<1x8x128xf32>
    %c0_14 = arith.constant 0 : index
    %c0_15 = arith.constant 0 : index
    %c0_16 = arith.constant 0 : index
    %35 = vector.load %arg5[%c0_14, %c0_15, %c0_16] : memref<1x8x128xf32, #tpu.memory_space<vmem>>, vector<1x8x128xf32>
    tpu.vector_store %arg5[%c0_14, %c0_15, %c0_16], %34 {strides = array<i32>} : memref<1x8x128xf32, #tpu.memory_space<vmem>>, vector<1x8x128xf32>,
    return
  }
  func.func @transform_0(%arg0: i32) -> (i32, i32) {
    %c0_i32 = arith.constant 0 : i32
    %c0_i32_0 = arith.constant 0 : i32
    return %arg0, %c0_i32 : i32, i32
  }
  func.func @transform_1(%arg0: i32) -> (i32, i32) {
    %c0_i32 = arith.constant 0 : i32
    %c0_i32_0 = arith.constant 0 : i32
    return %arg0, %c0_i32 : i32, i32
  }
  func.func @transform_2(%arg0: i32) -> (i32, i32) {
    %c0_i32 = arith.constant 0 : i32
    %c0_i32_0 = arith.constant 0 : i32
    return %arg0, %c0_i32 : i32, i32
  }
  func.func @transform_3(%arg0: i32) -> (i32, i32) {
    %c0_i32 = arith.constant 0 : i32
    %c0_i32_0 = arith.constant 0 : i32
    return %arg0, %c0_i32 : i32, i32
  }
  func.func @transform_4(%arg0: i32) -> (i32, i32, i32) {
    %c0_i32 = arith.constant 0 : i32
    %c0_i32_0 = arith.constant 0 : i32
    %c0_i32_1 = arith.constant 0 : i32
    return %arg0, %c0_i32, %c0_i32_0 : i32, i32, i32
  }
}

</mosaic_0001>

<llo_original>
// kernel: tpu_custom_call.1
$region0: #{tpu_custom_call.1}
  #allocation0 [shape = 'u32[]', space=smem, size = 0x4, offset = 0x4, fixed_abs, tag = 'smem constant byte address 0x4 - core index']
  #allocation1 [shape = 'u32[144,128]{1,0:T(1,128)}', space=vmem, size = 0x12000, scoped, tag = 'internal scratch']
  %s0 = inlined_call_operand.hbm [shape: f32[2,128], index: 0, kind: input, shape index: {}]
  %s1 = inlined_call_operand.hbm [shape: f32[2,128], index: 1, kind: input, shape index: {}]
  %s2 = inlined_call_operand.vmem [shape: f32[2,128], index: 2, kind: input, shape index: {}]
  %s3 = inlined_call_operand.hbm [shape: f32[2,128], index: 3, kind: output, shape index: {0}]
  %s4 = inlined_call_operand.hbm [shape: f32[1,8,128], index: 4, kind: output, shape index: {1}]
  %5 = xla_tuple %s3, %s4
  %s6 = sld [smem:[#allocation0]]
  $region38: #{tpu_custom_call.1} parent=0
    _
  %s8 = ssub.s32 1, %s6
  %s9 = scalar_select 0, %s8, %s6
  $region1: #{tpu_custom_call.1} parent=0
    #allocation2 [shape = 'u8[1024]{0}', space=vmem, size = 0x400, scoped, tag = 'input window, operand 0, single buffered']
    #allocation3 [shape = 's32[1]{0}', space=sflag, size = 0x4, scoped, tag = 'scoped memory for tpu_custom_call.1']
    #allocation4 [shape = 's32[1]{0}', space=sflag, size = 0x4, scoped, tag = 'scoped memory for tpu_custom_call.1']
    #allocation5 [shape = 'u8[1024]{0}', space=vmem, size = 0x400, scoped, tag = 'input window, operand 1, single buffered']
    #allocation6 [shape = 's32[1]{0}', space=sflag, size = 0x4, scoped, tag = 'scoped memory for tpu_custom_call.1']
    #allocation7 [shape = 'u8[1024]{0}', space=vmem, size = 0x400, scoped, tag = 'output window, operand 0, single buffered']
    #allocation8 [shape = 'u8[4096]{0}', space=vmem, size = 0x1000, scoped, tag = 'output window, operand 1, single buffered']
    #allocation9 [shape = 's32[1]{0}', space=sflag, size = 0x4, scoped, tag = 'scoped memory for tpu_custom_call.1']
    %10 = vsyncpa [#allocation3], 0
    %11 = vsyncpa [#allocation6], 0
    %12 = vsyncpa [#allocation4], 0
    %13 = vsyncpa [#allocation9], 0
    // Predicated region
    $region2: #{tpu_custom_call.1} parent=1 // pred_check
      _
    $region3: #{tpu_custom_call.1} parent=1 // pred_check_branch
      %15 = sbr.rel (0) target = $region5
    $region4: #{tpu_custom_call.1} parent=1 // pred_region
      %s17 = ssub.s32 32, 32
      %18 = vsyncadd [#allocation3], %s17
      %s20 = sshll.u32 [#allocation2], 4
      %s21 = int_to_ptr.vmem [resolvable:$true] %s20
      %23 = dma.hbm_to_vmem [thread:$0]  %s0, 32, %s21, [#allocation3]
    $region5: #{tpu_custom_call.1} parent=1 // pred_fallthru
      _
    // Predicated region
    $region6: #{tpu_custom_call.1} parent=1 // pred_check
      _
    $region7: #{tpu_custom_call.1} parent=1 // pred_check_branch
      %25 = sbr.rel (0) target = $region9
    $region8: #{tpu_custom_call.1} parent=1 // pred_region
      %s27 = ssub.s32 32, 32
      %28 = vsyncadd [#allocation6], %s27
      %s30 = sshll.u32 [#allocation5], 4
      %s31 = int_to_ptr.vmem [resolvable:$true] %s30
      %33 = dma.hbm_to_vmem [thread:$0]  %s1, 32, %s31, [#allocation6]
    $region9: #{tpu_custom_call.1} parent=1 // pred_fallthru
      _
    // Predicated region
    $region10: #{tpu_custom_call.1} parent=1 // pred_check
      _
    $region11: #{tpu_custom_call.1} parent=1 // pred_check_branch
      %35 = sbr.rel (0) target = $region13
    $region12: #{tpu_custom_call.1} parent=1 // pred_region
      _
    $region13: #{tpu_custom_call.1} parent=1 // pred_fallthru
      _
    // Predicated region
    $region14: #{tpu_custom_call.1} parent=1 // pred_check
      _
    $region15: #{tpu_custom_call.1} parent=1 // pred_check_branch
      %37 = sbr.rel (0) target = $region17
    $region16: #{tpu_custom_call.1} parent=1 // pred_region
      %38 = dma.done [#allocation3], 32
    $region17: #{tpu_custom_call.1} parent=1 // pred_fallthru
      _
    // Predicated region
    $region18: #{tpu_custom_call.1} parent=1 // pred_check
      _
    $region19: #{tpu_custom_call.1} parent=1 // pred_check_branch
      %40 = sbr.rel (0) target = $region21
    $region20: #{tpu_custom_call.1} parent=1 // pred_region
      %41 = dma.done [#allocation6], 32
    $region21: #{tpu_custom_call.1} parent=1 // pred_fallthru
      _
    %v42 = vld [vmem:[#allocation2] sm:$0x3]
    %v43 = vld [vmem:[#allocation5] sm:$0x3]
    %v44 = vld [vmem:[%s2] sm:$0x3]
    %v45 = vmax.f32 %v43, 0.0
    %v46 = vand.u32 2147483647, %v43
    %v47 = vsub.f32 0.0, %v46
    %v48 = vmul.f32 %v47, 1.442695
    %v49 = vpow.pop %v48
    %v50 = vadd.f32 %v49, 1.0
    %v51 = vlog2.pop %v50
    %v52 = vmul.f32 %v51, 0.6931472
    %v53 = vmul.f32 -0.5, %v49
    %v54 = vadd.f32 %v53, 1.0
    %v55 = vmul.f32 %v54, %v49
    %v56 = vand.u32 2147483647, %v49
    %vm57 = vcmp.lt.f32.partialorder %v56, 0.0004427343
    %v58 = vsel %vm57, %v55, %v52
    %v59 = vadd.f32 %v45, %v58
    %v60 = vmul.f32 %v59, %v44
    %v61 = vadd.f32 %v42, %v60
    %62 = vst [vmem:[#allocation7] sm:$0x3] %v61
    %vm63 = vcmp.lt.f32.partialorder %v43, -20.0
    %v64 = vmax.f32 %v59, 1.1754944e-38
    %v65 = vlog2.pop %v64
    %v66 = vmul.f32 %v65, 0.6931472
    %v67 = vsel %vm63, %v43, %v66
    %v68 = vmul.f32 %v59, %v59
    %v69 = vmul.f32 %v42, %v42
    %v70 = vadd.f32 %v68, %v69
    %v71 = vsub.f32 %v70, 1.0
    %v72 = vmul.f32 %v71, 0.5
    %v73 = vsub.f32 %v72, %v67
    %vm74 = vcmask 1041408
    %v75 = vsel %vm74, %v73, 0.0
    %76 = vadd.xlane.f32.xlu0 %v75
    %v77 = vpop.xlane.xlu0 %76
    %v78 = vrot.slane %v77, 4
    %v79 = vadd.f32 %v77, %v78
    %v80 = vrot.slane %v79, 2
    %v81 = vadd.f32 %v79, %v80
    %v82 = vrot.slane %v81, 1
    %v83 = vadd.f32 %v81, %v82
    %s84 = vtos %v83
    %v85 = vstv %s84
    %v86 = vadd.f32 %v85, 0.0
    %87 = vst [vmem:[#allocation8] sm:$0xff] %v86
    // Predicated region
    $region22: #{tpu_custom_call.1} parent=1 // pred_check
      _
    $region23: #{tpu_custom_call.1} parent=1 // pred_check_branch
      %89 = sbr.rel (0) target = $region25
    $region24: #{tpu_custom_call.1} parent=1 // pred_region
      %s91 = ssub.s32 32, 32
      %92 = vsyncadd [#allocation4], %s91
      %s94 = sshll.u32 [#allocation7], 4
      %s95 = int_to_ptr.vmem [resolvable:$true] %s94
      %97 = dma.vmem_to_hbm [thread:$0]  %s95, 32, %s3, [#allocation4]
    $region25: #{tpu_custom_call.1} parent=1 // pred_fallthru
      _
    // Predicated region
    $region26: #{tpu_custom_call.1} parent=1 // pred_check
      _
    $region27: #{tpu_custom_call.1} parent=1 // pred_check_branch
      %99 = sbr.rel (0) target = $region29
    $region28: #{tpu_custom_call.1} parent=1 // pred_region
      %s101 = ssub.s32 128, 128
      %102 = vsyncadd [#allocation9], %s101
      %s104 = sshll.u32 [#allocation8], 4
      %s105 = int_to_ptr.vmem [resolvable:$true] %s104
      %107 = dma.vmem_to_hbm [thread:$0]  %s105, 128, %s4, [#allocation9]
    $region29: #{tpu_custom_call.1} parent=1 // pred_fallthru
      _
    // Predicated region
    $region30: #{tpu_custom_call.1} parent=1 // pred_check
      _
    $region31: #{tpu_custom_call.1} parent=1 // pred_check_branch
      %109 = sbr.rel (0) target = $region33
    $region32: #{tpu_custom_call.1} parent=1 // pred_region
      %110 = dma.done [#allocation4], 32
    $region33: #{tpu_custom_call.1} parent=1 // pred_fallthru
      _
    // Predicated region
    $region34: #{tpu_custom_call.1} parent=1 // pred_check
      _
    $region35: #{tpu_custom_call.1} parent=1 // pred_check_branch
      %112 = sbr.rel (0) target = $region37
    $region36: #{tpu_custom_call.1} parent=1 // pred_region
      %113 = dma.done [#allocation9], 128
    $region37: #{tpu_custom_call.1} parent=1 // pred_fallthru
      _
    %114 = vsyncpa [#allocation3], 1
    %115 = vsyncpa [#allocation6], 1
    %116 = vsyncpa [#allocation4], 1
    %117 = vsyncpa [#allocation9], 1

</llo_original>
